<compile_context>
chip_gen: v5e
topology: v5e:2x2
jax: 0.10.0
libtpu: 0.0.40
codegen_flags: <defaults>
</compile_context>

<pallas_src>
import functools

import jax
import jax.numpy as jnp
from jax import lax
from jax.experimental import pallas as pl
from jax.experimental.pallas import tpu as pltpu

_LANES = 128
# Safe on every generation: v5e/v6e have 128 MiB physical VMEM, v7x has 64 MiB
# (32 MiB scoped default).  Our worst case is 2 inputs x 2 buffers x 4 MiB = 16 MiB.
_VMEM_LIMIT_BYTES = 32 * 1024 * 1024


def _device_kind():
    try:
        return jax.devices()[0].device_kind.lower()
    except Exception:
        return ""


def _auto_tile_rows(kind):
    # rows x 128 lanes x f32: 8192 rows -> 4 MiB/block (16 MiB double-buffered),
    # 4096 rows -> 2 MiB/block (8 MiB double-buffered).
    if "v7" in kind or "7x" in kind:
        return 8192
    if "v6" in kind:
        return 8192
    return 4096  # v5e / unknown: stay comfortably inside scoped VMEM


def _auto_num_parts(kind):
    # v7x has 2 TensorCores per chip; v5e/v6e are single-TC, where an extra
    # leading grid axis is pure overhead.
    return 2 if ("v7" in kind or "7x" in kind) else 1


def _sum_sq_diff_kernel(pred_ref, tgt_ref, out_ref, *, tile_rows, tiles_per_part,
                        total_tiles, valid_rows, two_d):
    """Accumulates sum((pred - tgt)**2) into a resident (1, 8, 128) output block.

    Grid is either (total_tiles,) ["arbitrary"] or (num_parts, tiles_per_part)
    [CORE_PARALLEL, ARBITRARY].  The cross-lane reduction, 1/N and coefficient
    scaling all happen on the tiny (num_parts, 8, 128) partial sums outside.
    """
    if two_d:
        i = pl.program_id(1)
        tile = pl.program_id(0) * tiles_per_part + i
    else:
        i = pl.program_id(0)
        tile = i

    @pl.when(i == 0)
    def _():
        out_ref[...] = jnp.zeros_like(out_ref)

    def accumulate(mask_tail):
        d = pred_ref[...].astype(jnp.float32) - tgt_ref[...].astype(jnp.float32)
        if mask_tail:
            # Only the partially out-of-bounds final tile pays for the mask;
            # jnp.where (a select) is NaN-safe for the undefined fetched bytes.
            row = tile * tile_rows + lax.broadcasted_iota(jnp.int32, d.shape, 0)
            d = jnp.where(row < valid_rows, d, jnp.float32(0.0))
        sq = d * d
        if tile_rows % 8 == 0:
            # Fold the tile into the vreg-shaped (8, 128) accumulator: pure VPU adds.
            out_ref[0, :, :] += jnp.sum(sq.reshape(tile_rows // 8, 8, _LANES), axis=0)
        else:
            # Tiny-input fallback (rows not 8-aligned): one sublane reduce.
            out_ref[0, 0:1, :] += jnp.sum(sq, axis=0, keepdims=True)

    ragged = (valid_rows % tile_rows) != 0  # compile-time constant
    if not ragged:
        accumulate(False)
    elif total_tiles == 1:
        accumulate(True)
    else:
        is_tail = tile == (total_tiles - 1)

        @pl.when(jnp.logical_not(is_tail))
        def _():
            accumulate(False)

        @pl.when(is_tail)
        def _():
            accumulate(True)


class MSELossComponent:
    """JAX/Pallas port of LossComponent with a concrete MSE eval_loss.

    forward(**kwargs) == coefficient * eval_loss(**kwargs), as in the PyTorch
    abstract base class.
    """

    def __init__(self, name, coefficient=1.0, tile_rows=None, num_parts=None,
                 min_kernel_elems=64 * 1024):
        self.name = name
        self.coefficient = float(coefficient)
        kind = _device_kind()
        self.tile_rows = int(tile_rows) if tile_rows is not None else _auto_tile_rows(kind)
        self.num_parts = int(num_parts) if num_parts is not None else _auto_num_parts(kind)
        self.min_kernel_elems = int(min_kernel_elems)

    def get_name(self):
        return self.name

    def __call__(self, **kwargs):
        # LossComponent.forward semantics.
        return self.coefficient * self.eval_loss(**kwargs)

    def eval_loss(self, pred, target):
        assert pred.shape == target.shape, (pred.shape, target.shape)
        n_elem = pred.size
        if n_elem == 0:
            return jnp.float32(0.0)

        # Small-input bypass: pallas_call launch + per-step overhead dominates
        # below a few hundred KiB; a fused XLA reduction is strictly faster.
        if n_elem < max(self.min_kernel_elems, _LANES):
            d = pred.astype(jnp.float32) - target.astype(jnp.float32)
            return jnp.mean(d * d)

        p = pred.reshape(-1)
        t = target.reshape(-1)
        n_main = (n_elem // _LANES) * _LANES
        rows = n_main // _LANES

        # Ragged (<128 elem) lane tail handled outside the kernel; no full-tensor
        # pad copy.  TODO(synk): the prefix slice may still materialize a copy for
        # ragged numel; an in-kernel flat gather would avoid it entirely.
        tail_sum = jnp.float32(0.0)
        if n_main != n_elem:
            dt = p[n_main:].astype(jnp.float32) - t[n_main:].astype(jnp.float32)
            tail_sum = jnp.sum(dt * dt)
            p = p[:n_main]
            t = t[:n_main]
        p = p.reshape(rows, _LANES)
        t = t.reshape(rows, _LANES)

        # Biggest lane-dense (rows, 128) block allowed by the config.
        tile_rows = min(self.tile_rows, rows)
        if tile_rows < rows and tile_rows % 8 != 0:
            tile_rows = max(8, (tile_rows // 8) * 8)
        total_tiles = pl.cdiv(rows, tile_rows)

        # Only split across cores when the split is exact: no clamped redundant
        # trailing steps that would re-DMA the last tile for nothing.
        num_parts = self.num_parts if (
            self.num_parts > 1 and total_tiles > 1
            and total_tiles % self.num_parts == 0
        ) else 1
        tiles_per_part = total_tiles // num_parts
        two_d = num_parts > 1

        kernel = functools.partial(
            _sum_sq_diff_kernel,
            tile_rows=tile_rows,
            tiles_per_part=tiles_per_part,
            total_tiles=total_tiles,
            valid_rows=rows,
            two_d=two_d,
        )

        if two_d:
            grid = (num_parts, tiles_per_part)
            in_map = lambda c, i: (c * tiles_per_part + i, 0)
            out_map = lambda c, i: (c, 0, 0)
        else:
            grid = (total_tiles,)
            in_map = lambda i: (i, 0)
            out_map = lambda i: (0, 0, 0)

        def run(dim_semantics):
            return pl.pallas_call(
                kernel,
                out_shape=jax.ShapeDtypeStruct((num_parts, 8, _LANES), jnp.float32),
                grid=grid,
                in_specs=[
                    pl.BlockSpec((tile_rows, _LANES), in_map),
                    pl.BlockSpec((tile_rows, _LANES), in_map),
                ],
                out_specs=pl.BlockSpec((1, 8, _LANES), out_map),
                compiler_params=pltpu.CompilerParams(
                    dimension_semantics=dim_semantics,
                    vmem_limit_bytes=_VMEM_LIMIT_BYTES,
                ),
            )(p, t)

        if two_d:
            try:
                # Guarantee the 2-TC shard on v7x (plain "parallel" does not).
                partials = run((pltpu.CORE_PARALLEL, pltpu.ARBITRARY))
            except Exception:
                # TODO(synk): CORE_PARALLEL rejected by this toolchain/chip;
                # falling back to plain parallel semantics.
                partials = run(("parallel", "arbitrary"))
        else:
            partials = run(("arbitrary",))

        # Single cheap cross-lane/part reduction + 1/N outside the hot loop.
        total = jnp.sum(partials) + tail_sum
        return total * jnp.float32(1.0 / n_elem)


if __name__ == "__main__":
    key = jax.random.PRNGKey(0)
    keys = jax.random.split(key, 8)

    def ref_mse(c, p, t):
        d = p.astype(jnp.float32) - t.astype(jnp.float32)
        return c * jnp.mean(d * d)

    # 1) Small NCHW input (kernel forced via min_kernel_elems=0): single tile.
    pred = jax.random.normal(keys[0], (2, 4, 16, 16), dtype=jnp.float32)
    target = jax.random.normal(keys[1], (2, 4, 16, 16), dtype=jnp.float32)
    comp = MSELossComponent("mse", coefficient=0.5, min_kernel_elems=0)
    loss = jax.block_until_ready(comp(pred=pred, target=target))
    r = ref_mse(0.5, pred, target)
    assert jnp.allclose(loss, r, rtol=1e-4, atol=1e-6), (loss, r)

    # 2) Multi-tile with a ragged last row-tile: exercises the pl.when-gated mask.
    pred2 = jax.random.normal(keys[2], (5, 4, 16, 16), dtype=jnp.float32)
    target2 = jax.random.normal(keys[3], (5, 4, 16, 16), dtype=jnp.float32)
    comp2 = MSELossComponent("mse_tiled", coefficient=2.0, tile_rows=16,
                             min_kernel_elems=0)
    loss2 = jax.block_until_ready(comp2(pred=pred2, target=target2))
    r2 = ref_mse(2.0, pred2, target2)
    assert jnp.allclose(loss2, r2, rtol=1e-4, atol=1e-6), (loss2, r2)

    # 3) numel not a multiple of 128: aligned prefix in-kernel, <128 tail in XLA.
    pred3 = jax.random.normal(keys[4], (2, 3, 17, 16), dtype=jnp.float32)
    target3 = jax.random.normal(keys[5], (2, 3, 17, 16), dtype=jnp.float32)
    comp3 = MSELossComponent("mse_ragged", coefficient=1.5, min_kernel_elems=0)
    loss3 = jax.block_until_ready(comp3(pred=pred3, target=target3))
    r3 = ref_mse(1.5, pred3, target3)
    assert jnp.allclose(loss3, r3, rtol=1e-4, atol=1e-6), (loss3, r3)

    # 4) Default config on a medium tensor: kernel path with the auto-sized tile.
    pred4 = jax.random.normal(keys[6], (8, 4, 128, 64), dtype=jnp.float32)
    target4 = jax.random.normal(keys[7], (8, 4, 128, 64), dtype=jnp.float32)
    comp4 = MSELossComponent("mse_default", coefficient=1.0)
    loss4 = jax.block_until_ready(comp4(pred=pred4, target=target4))
    r4 = ref_mse(1.0, pred4, target4)
    assert jnp.allclose(loss4, r4, rtol=1e-4, atol=1e-6), (loss4, r4)

    # 5) Small-input bypass path (below min_kernel_elems -> fused XLA reduction).
    comp5 = MSELossComponent("mse_small", coefficient=3.0)
    loss5 = jax.block_until_ready(comp5(pred=pred, target=target))
    r5 = ref_mse(3.0, pred, target)
    assert jnp.allclose(loss5, r5, rtol=1e-4, atol=1e-6), (loss5, r5)

    print("KERNEL_OK")
</pallas_src>

<mosaic_0001>
module attributes {stable_mosaic.version = 11 : i64} {
  func.func @_sum_sq_diff_kernel(%arg0: i32, %arg1: memref<16x128xf32, #tpu.memory_space<vmem>>, %arg2: memref<16x128xf32, #tpu.memory_space<vmem>>, %arg3: memref<1x8x128xf32, #tpu.memory_space<vmem>>) attributes {dimension_semantics = [#tpu.dimension_semantics<arbitrary>], iteration_bounds = array<i64: 1>, scalar_prefetch = 0 : i64, scratch_operands = 0 : i64, tpu.core_type = #tpu.core_type<tc>, window_params = [{transform_indices = @transform_0, window_bounds = array<i64: 16, 128>}, {transform_indices = @transform_1, window_bounds = array<i64: 16, 128>}, {pipeline_mode = #tpu.pipeline_mode<synchronous>, transform_indices = @transform_2, window_bounds = array<i64: 1, 8, 128>}]} {
    %c0_i32 = arith.constant 0 : i32
    %0 = arith.cmpi eq, %arg0, %c0_i32 : i32
    %1 = arith.extui %0 : i1 to i32
    %c0_i32_0 = arith.constant 0 : i32
    %2 = arith.cmpi ne, %1, %c0_i32_0 : i32
    scf.if %2 {
      %cst_10 = arith.constant 0.000000e+00 : f32
      %15 = vector.broadcast %cst_10 : f32 to vector<1x8x128xf32>
      %c0_11 = arith.constant 0 : index
      %c0_12 = arith.constant 0 : index
      %c0_13 = arith.constant 0 : index
      %16 = vector.load %arg3[%c0_11, %c0_12, %c0_13] : memref<1x8x128xf32, #tpu.memory_space<vmem>>, vector<1x8x128xf32>
      tpu.vector_store %arg3[%c0_11, %c0_12, %c0_13], %15 {strides = array<i32>} : memref<1x8x128xf32, #tpu.memory_space<vmem>>, vector<1x8x128xf32>,
    } else {
    }
    %c0 = arith.constant 0 : index
    %c0_1 = arith.constant 0 : index
    %3 = vector.load %arg1[%c0, %c0_1] : memref<16x128xf32, #tpu.memory_space<vmem>>, vector<16x128xf32>
    %c0_2 = arith.constant 0 : index
    %c0_3 = arith.constant 0 : index
    %4 = vector.load %arg2[%c0_2, %c0_3] : memref<16x128xf32, #tpu.memory_space<vmem>>, vector<16x128xf32>
    %5 = arith.subf %3, %4 : vector<16x128xf32>
    %6 = arith.mulf %5, %5 : vector<16x128xf32>
    %c0_4 = arith.constant 0 : index
    %c0_5 = arith.constant 0 : index
    %c0_6 = arith.constant 0 : index
    %7 = vector.load %arg3[%c0_4, %c0_5, %c0_6] : memref<1x8x128xf32, #tpu.memory_space<vmem>>, vector<1x8x128xf32>
    %8 = vector.shape_cast %7 : vector<1x8x128xf32> to vector<8x128xf32>
    %9 = vector.shape_cast %6 : vector<16x128xf32> to vector<2x8x128xf32>
    %cst = arith.constant dense<0.000000e+00> : vector<8x128xf32>
    %10 = vector.multi_reduction <add>, %9, %cst [0] : vector<2x8x128xf32> to vector<8x128xf32>
    %11 = arith.addf %8, %10 : vector<8x128xf32>
    %c0_7 = arith.constant 0 : index
    %c0_8 = arith.constant 0 : index
    %c0_9 = arith.constant 0 : index
    %12 = vector.load %arg3[%c0_7, %c0_8, %c0_9] : memref<1x8x128xf32, #tpu.memory_space<vmem>>, vector<1x8x128xf32>
    %13 = vector.shape_cast %12 : vector<1x8x128xf32> to vector<8x128xf32>
    %14 = vector.shape_cast %11 : vector<8x128xf32> to vector<1x8x128xf32>
    tpu.vector_store %arg3[%c0_7, %c0_8, %c0_9], %14 {strides = array<i32>} : memref<1x8x128xf32, #tpu.memory_space<vmem>>, vector<1x8x128xf32>,
    return
  }
  func.func @transform_0(%arg0: i32) -> (i32, i32) {
    %c0_i32 = arith.constant 0 : i32
    %c0_i32_0 = arith.constant 0 : i32
    return %arg0, %c0_i32 : i32, i32
  }
  func.func @transform_1(%arg0: i32) -> (i32, i32) {
    %c0_i32 = arith.constant 0 : i32
    %c0_i32_0 = arith.constant 0 : i32
    return %arg0, %c0_i32 : i32, i32
  }
  func.func @transform_2(%arg0: i32) -> (i32, i32, i32) {
    %c0_i32 = arith.constant 0 : i32
    %c0_i32_0 = arith.constant 0 : i32
    %c0_i32_1 = arith.constant 0 : i32
    %c0_i32_2 = arith.constant 0 : i32
    return %c0_i32, %c0_i32_0, %c0_i32_1 : i32, i32, i32
  }
}

</mosaic_0001>

<llo_original>
// kernel: tpu_custom_call.1
$region0: #{tpu_custom_call.1}
  #allocation0 [shape = 'u32[]', space=smem, size = 0x4, offset = 0x4, fixed_abs, tag = 'smem constant byte address 0x4 - core index']
  #allocation1 [shape = 'u32[72,128]{1,0:T(1,128)}', space=vmem, size = 0x9000, scoped, tag = 'internal scratch']
  %s0 = inlined_call_operand.hbm [shape: f32[16,128], index: 0, kind: input, shape index: {}]
  %s1 = inlined_call_operand.hbm [shape: f32[16,128], index: 1, kind: input, shape index: {}]
  %s2 = inlined_call_operand.hbm [shape: f32[1,8,128], index: 2, kind: output, shape index: {}]
  %s3 = sld [smem:[#allocation0]]
  $region30: #{tpu_custom_call.1} parent=0
    _
  %s5 = ssub.s32 1, %s3
  %s6 = scalar_select 0, %s5, %s3
  $region1: #{tpu_custom_call.1} parent=0
    #allocation2 [shape = 'u8[8192]{0}', space=vmem, size = 0x2000, scoped, tag = 'input window, operand 0, single buffered']
    #allocation3 [shape = 's32[1]{0}', space=sflag, size = 0x4, scoped, tag = 'scoped memory for tpu_custom_call.1']
    #allocation4 [shape = 's32[1]{0}', space=sflag, size = 0x4, scoped, tag = 'scoped memory for tpu_custom_call.1']
    #allocation5 [shape = 'u8[8192]{0}', space=vmem, size = 0x2000, scoped, tag = 'input window, operand 1, single buffered']
    #allocation6 [shape = 's32[1]{0}', space=sflag, size = 0x4, scoped, tag = 'scoped memory for tpu_custom_call.1']
    #allocation7 [shape = 'u8[4096]{0}', space=vmem, size = 0x1000, scoped, tag = 'output window, operand 0, single buffered']
    %7 = vsyncpa [#allocation3], 0
    %8 = vsyncpa [#allocation6], 0
    %9 = vsyncpa [#allocation4], 0
    // Predicated region
    $region2: #{tpu_custom_call.1} parent=1 // pred_check
      _
    $region3: #{tpu_custom_call.1} parent=1 // pred_check_branch
      %11 = sbr.rel (0) target = $region5
    $region4: #{tpu_custom_call.1} parent=1 // pred_region
      %13 = vsyncadd [#allocation3], 0
      %s14 = sshll.u32 %s0, 4
      %s15 = int_to_ptr.hbm [resolvable:$true] %s14
      %s16 = sshll.u32 [#allocation2], 4
      %s17 = int_to_ptr.vmem [resolvable:$true] %s16
      %22 = dma.hbm_to_vmem [thread:$0]  %s15, 256, %s17, [#allocation3], 128, 128, 8
    $region5: #{tpu_custom_call.1} parent=1 // pred_fallthru
      _
    // Predicated region
    $region6: #{tpu_custom_call.1} parent=1 // pred_check
      _
    $region7: #{tpu_custom_call.1} parent=1 // pred_check_branch
      %24 = sbr.rel (0) target = $region9
    $region8: #{tpu_custom_call.1} parent=1 // pred_region
      %26 = vsyncadd [#allocation6], 0
      %s27 = sshll.u32 %s1, 4
      %s28 = int_to_ptr.hbm [resolvable:$true] %s27
      %s29 = sshll.u32 [#allocation5], 4
      %s30 = int_to_ptr.vmem [resolvable:$true] %s29
      %35 = dma.hbm_to_vmem [thread:$0]  %s28, 256, %s30, [#allocation6], 128, 128, 8
    $region9: #{tpu_custom_call.1} parent=1 // pred_fallthru
      _
    // Predicated region
    $region10: #{tpu_custom_call.1} parent=1 // pred_check
      _
    $region11: #{tpu_custom_call.1} parent=1 // pred_check_branch
      %37 = sbr.rel (0) target = $region13
    $region12: #{tpu_custom_call.1} parent=1 // pred_region
      %39 = dma.done [#allocation3], 256
    $region13: #{tpu_custom_call.1} parent=1 // pred_fallthru
      _
    // Predicated region
    $region14: #{tpu_custom_call.1} parent=1 // pred_check
      _
    $region15: #{tpu_custom_call.1} parent=1 // pred_check_branch
      %41 = sbr.rel (0) target = $region17
    $region16: #{tpu_custom_call.1} parent=1 // pred_region
      %43 = dma.done [#allocation6], 256
    $region17: #{tpu_custom_call.1} parent=1 // pred_fallthru
      _
    %p44 = scmp.eq.s32.totalorder 0, 0
    // Predicated region
    $region18: #{tpu_custom_call.1} parent=1 // pred_check
      %p45 = pneg %p44
    $region19: #{tpu_custom_call.1} parent=1 // pred_check_branch
      %47 = sbr.rel (%p45) target = $region21
    $region20: #{tpu_custom_call.1} parent=1 // pred_region
      %48 = vst [vmem:[#allocation7] sm:$0xff] 0.0
    $region21: #{tpu_custom_call.1} parent=1 // pred_fallthru
      _
    %v49 = vld [vmem:[#allocation2] sm:$0xff]
    %v50 = vld [vmem:[#allocation2 + $0x8] sm:$0xff]
    %v51 = vld [vmem:[#allocation5] sm:$0xff]
    %v52 = vld [vmem:[#allocation5 + $0x8] sm:$0xff]
    %v53 = vsub.f32 %v49, %v51
    %v54 = vsub.f32 %v50, %v52
    %v55 = vmul.f32 %v53, %v53
    %v56 = vmul.f32 %v54, %v54
    %v57 = vld [vmem:[#allocation7] sm:$0xff]
    %v58 = vadd.f32 %v55, %v56
    %v59 = vadd.f32 %v57, %v58
    %60 = vst [vmem:[#allocation7] sm:$0xff] %v59
    // Predicated region
    $region22: #{tpu_custom_call.1} parent=1 // pred_check
      _
    $region23: #{tpu_custom_call.1} parent=1 // pred_check_branch
      %62 = sbr.rel (0) target = $region25
    $region24: #{tpu_custom_call.1} parent=1 // pred_region
      %64 = vsyncadd [#allocation4], 0
      %s66 = sshll.u32 [#allocation7], 4
      %s67 = int_to_ptr.vmem [resolvable:$true] %s66
      %s68 = sshll.u32 %s2, 4
      %s69 = int_to_ptr.hbm [resolvable:$true] %s68
      %71 = dma.vmem_to_hbm [thread:$0]  %s67, 128, %s69, [#allocation4]
    $region25: #{tpu_custom_call.1} parent=1 // pred_fallthru
      _
    // Predicated region
    $region26: #{tpu_custom_call.1} parent=1 // pred_check
      _
    $region27: #{tpu_custom_call.1} parent=1 // pred_check_branch
      %73 = sbr.rel (0) target = $region29
    $region28: #{tpu_custom_call.1} parent=1 // pred_region
      %75 = dma.done [#allocation4], 128
    $region29: #{tpu_custom_call.1} parent=1 // pred_fallthru
      _
    %76 = vsyncpa [#allocation3], 1
    %77 = vsyncpa [#allocation6], 1
    %78 = vsyncpa [#allocation4], 1

</llo_original>
